<compile_context>
chip_gen: v5e
topology: v5e:2x2
jax: 0.10.0
libtpu: 0.0.40
codegen_flags: <defaults>
</compile_context>

<pallas_src>
import functools
import math

import jax
import jax.numpy as jnp
from jax.experimental import pallas as pl
from jax.experimental.pallas import tpu as pltpu


def _round_up(x: int, m: int) -> int:
    return (x + m - 1) // m * m


def _word_embedding_kernel(
    ids_ref,      # SMEM (N_pad,) int32   -- scalar-prefetched, flattened token ids
    emb_hbm,      # HBM  (V, E)           -- embedding table, left in place (pl.ANY)
    out_ref,      # VMEM (tpb, E)         -- output tile for this grid step
    gather_buf,   # VMEM (tpb, E)         -- row-gather staging buffer (scratch)
    sems,         # DMA semaphores (nbuf,)
    *,
    tokens_per_block: int,
    vocab_size: int,
    scale: float,
    nbuf: int,
):
    base = pl.multiple_of(pl.program_id(0) * tokens_per_block, tokens_per_block)

    def start_row(j, slot):
        # Bounds-safe: clamp id so the HBM row DMA can never read out of range.
        tok = jnp.clip(ids_ref[base + j], 0, vocab_size - 1)
        pltpu.make_async_copy(
            emb_hbm.at[pl.ds(tok, 1), :],
            gather_buf.at[pl.ds(j, 1), :],
            sems.at[slot],
        ).start()

    def wait_row(j, slot):
        pltpu.make_async_copy(
            emb_hbm.at[pl.ds(0, 1), :],          # shape-only descriptor for the wait
            gather_buf.at[pl.ds(j, 1), :],
            sems.at[slot],
        ).wait()

    # Prime the pipeline: `nbuf` row DMAs outstanding (small static unroll).
    for j in range(nbuf):
        start_row(j, j)

    # Rolling window: wait for row j, immediately refill its slot with row j+nbuf.
    @pl.loop(0, tokens_per_block)
    def _(j):
        slot = j % nbuf
        wait_row(j, slot)

        @pl.when(j + nbuf < tokens_per_block)
        def _():
            start_row(j + nbuf, slot)

    # One full-block VPU scale + one lane-dense full-sublane store for the tile.
    out_ref[...] = (gather_buf[...] * scale).astype(out_ref.dtype)


def word_embedding(
    tokens,
    emb_table,
    *,
    tokens_per_block: int = 256,
    dmas_in_flight: int = 16,
    vmem_budget_bytes: int = 9 * 1024 * 1024,
):
    """Equivalent of `nn.Embedding(V, E)(tokens.long()) * sqrt(E)`."""
    B, S = tokens.shape
    V, E = emb_table.shape
    N = B * S
    out_dtype = emb_table.dtype
    scale = math.sqrt(float(E))

    # Dtype-aware sublane packing (f32: 8, bf16: 16, int8/fp8: 32).
    itemsize = jnp.dtype(out_dtype).itemsize
    sublane = max(1, 32 // itemsize)

    # Keep gather_buf (1x tile) + double-buffered output (2x tile) under budget.
    row_bytes = E * itemsize
    tpb_budget = (vmem_budget_bytes // (3 * row_bytes)) // sublane * sublane
    tpb_budget = max(sublane, tpb_budget)

    tpb = _round_up(min(tokens_per_block, tpb_budget), sublane)
    tpb = max(sublane, min(tpb, _round_up(N, sublane)))
    n_pad = _round_up(N, tpb)

    ids = tokens.reshape(N).astype(jnp.int32)      # tokens.long() equivalent
    if n_pad != N:
        # Padded rows gather row 0; they are discarded by the slice below.
        ids = jnp.pad(ids, (0, n_pad - N))

    nbuf = max(1, min(dmas_in_flight, tpb))

    kernel = functools.partial(
        _word_embedding_kernel,
        tokens_per_block=tpb,
        vocab_size=V,
        scale=scale,
        nbuf=nbuf,
    )

    out_flat = pl.pallas_call(
        kernel,
        out_shape=jax.ShapeDtypeStruct((n_pad, E), out_dtype),
        grid_spec=pltpu.PrefetchScalarGridSpec(
            num_scalar_prefetch=1,                      # ids land in SMEM before the grid
            grid=(n_pad // tpb,),
            in_specs=[
                pl.BlockSpec(memory_space=pl.ANY),      # table stays in HBM, manual DMA
            ],
            out_specs=pl.BlockSpec((tpb, E), lambda i, ids_ref: (i, 0)),
            scratch_shapes=[
                pltpu.VMEM((tpb, E), out_dtype),        # row-gather staging buffer
                pltpu.SemaphoreType.DMA((nbuf,)),       # one sem per in-flight row DMA
            ],
        ),
        compiler_params=pltpu.CompilerParams(
            # Disjoint output tiles -> safe to shard across TCs (v7x megacore).
            dimension_semantics=("parallel",),
        ),
    )(ids, emb_table)

    return out_flat[:N].reshape(B, S, E)


if __name__ == "__main__":
    # Small deterministic setup
    VOCAB_SIZE = 64
    EMB_SIZE = 128
    BATCH = 2
    SEQ = 8

    key = jax.random.PRNGKey(0)
    k_tok, k_emb = jax.random.split(key)

    tokens = jax.random.randint(k_tok, (BATCH, SEQ), 0, VOCAB_SIZE, dtype=jnp.int32)
    # Deterministic "parameter" init (nn.Embedding default init is N(0,1))
    emb_table = jax.random.normal(k_emb, (VOCAB_SIZE, EMB_SIZE), dtype=jnp.float32)

    out = word_embedding(tokens, emb_table)
    out = jax.block_until_ready(out)

    # Reference check (plain JAX)
    ref = emb_table[tokens] * math.sqrt(EMB_SIZE)
    assert out.shape == (BATCH, SEQ, EMB_SIZE)
    assert jnp.allclose(out, ref, atol=1e-5, rtol=1e-5)

    print("KERNEL_OK")
</pallas_src>

<mosaic_0001>
module attributes {stable_mosaic.version = 11 : i64} {
  func.func @_word_embedding_kernel(%arg0: i32, %arg1: memref<16xi32, #tpu.memory_space<smem>>, %arg2: memref<64x128xf32, #tpu.memory_space<any>>, %arg3: memref<16x128xf32, #tpu.memory_space<vmem>>, %arg4: memref<16x128xf32, #tpu.memory_space<vmem>>, %arg5: memref<16x!tpu.dma_semaphore, #tpu.memory_space<semaphore_mem>>) attributes {dimension_semantics = [#tpu.dimension_semantics<parallel>], iteration_bounds = array<i64: 1>, scalar_prefetch = 1 : i64, scratch_operands = 2 : i64, tpu.core_type = #tpu.core_type<tc>, window_params = [{}, {transform_indices = @transform_1, window_bounds = array<i64: 16, 128>}]} {
    %c16_i32 = arith.constant 16 : i32
    %0 = arith.muli %arg0, %c16_i32 : i32
    %1 = tpu.assume_multiple %0, 16 : i32
    %c0_i32 = arith.constant 0 : i32
    %2 = arith.addi %1, %c0_i32 : i32
    %3 = arith.index_cast %2 : i32 to index
    %4 = memref.load %arg1[%3] : memref<16xi32, #tpu.memory_space<smem>>
    %c0_i32_0 = arith.constant 0 : i32
    %c63_i32 = arith.constant 63 : i32
    %5 = arith.maxsi %c0_i32_0, %4 : i32
    %6 = arith.minsi %c63_i32, %5 : i32
    %c0_i32_1 = arith.constant 0 : i32
    %c0_i32_2 = arith.constant 0 : i32
    %7 = tpu.memref_slice %arg2[%6, %c0_i32_2] : memref<64x128xf32, #tpu.memory_space<any>> -> memref<1x128xf32, #tpu.memory_space<any>>
    %c0_i32_3 = arith.constant 0 : i32
    %c0_i32_4 = arith.constant 0 : i32
    %8 = tpu.memref_slice %arg4[%c0_i32_3, %c0_i32_4] : memref<16x128xf32, #tpu.memory_space<vmem>> -> memref<1x128xf32, #tpu.memory_space<vmem>>
    %9 = tpu.memref_slice %arg5[%c0_i32_1] : memref<16x!tpu.dma_semaphore, #tpu.memory_space<semaphore_mem>> -> memref<1x!tpu.dma_semaphore, #tpu.memory_space<semaphore_mem>>
    %10 = tpu.memref_squeeze %9 : memref<1x!tpu.dma_semaphore, #tpu.memory_space<semaphore_mem>> -> memref<!tpu.dma_semaphore, #tpu.memory_space<semaphore_mem>>
    tpu.enqueue_dma source(%7 : memref<1x128xf32, #tpu.memory_space<any>>) target(%8 : memref<1x128xf32, #tpu.memory_space<vmem>>) target_semaphore(%10 : memref<!tpu.dma_semaphore, #tpu.memory_space<semaphore_mem>>)
    %c1_i32 = arith.constant 1 : i32
    %11 = arith.addi %1, %c1_i32 : i32
    %12 = arith.index_cast %11 : i32 to index
    %13 = memref.load %arg1[%12] : memref<16xi32, #tpu.memory_space<smem>>
    %c0_i32_5 = arith.constant 0 : i32
    %c63_i32_6 = arith.constant 63 : i32
    %14 = arith.maxsi %c0_i32_5, %13 : i32
    %15 = arith.minsi %c63_i32_6, %14 : i32
    %c1_i32_7 = arith.constant 1 : i32
    %c0_i32_8 = arith.constant 0 : i32
    %16 = tpu.memref_slice %arg2[%15, %c0_i32_8] : memref<64x128xf32, #tpu.memory_space<any>> -> memref<1x128xf32, #tpu.memory_space<any>>
    %c1_i32_9 = arith.constant 1 : i32
    %c0_i32_10 = arith.constant 0 : i32
    %17 = tpu.memref_slice %arg4[%c1_i32_9, %c0_i32_10] : memref<16x128xf32, #tpu.memory_space<vmem>> -> memref<1x128xf32, #tpu.memory_space<vmem>>
    %18 = tpu.memref_slice %arg5[%c1_i32_7] : memref<16x!tpu.dma_semaphore, #tpu.memory_space<semaphore_mem>> -> memref<1x!tpu.dma_semaphore, #tpu.memory_space<semaphore_mem>>
    %19 = tpu.memref_squeeze %18 : memref<1x!tpu.dma_semaphore, #tpu.memory_space<semaphore_mem>> -> memref<!tpu.dma_semaphore, #tpu.memory_space<semaphore_mem>>
    tpu.enqueue_dma source(%16 : memref<1x128xf32, #tpu.memory_space<any>>) target(%17 : memref<1x128xf32, #tpu.memory_space<vmem>>) target_semaphore(%19 : memref<!tpu.dma_semaphore, #tpu.memory_space<semaphore_mem>>)
    %c2_i32 = arith.constant 2 : i32
    %20 = arith.addi %1, %c2_i32 : i32
    %21 = arith.index_cast %20 : i32 to index
    %22 = memref.load %arg1[%21] : memref<16xi32, #tpu.memory_space<smem>>
    %c0_i32_11 = arith.constant 0 : i32
    %c63_i32_12 = arith.constant 63 : i32
    %23 = arith.maxsi %c0_i32_11, %22 : i32
    %24 = arith.minsi %c63_i32_12, %23 : i32
    %c2_i32_13 = arith.constant 2 : i32
    %c0_i32_14 = arith.constant 0 : i32
    %25 = tpu.memref_slice %arg2[%24, %c0_i32_14] : memref<64x128xf32, #tpu.memory_space<any>> -> memref<1x128xf32, #tpu.memory_space<any>>
    %c2_i32_15 = arith.constant 2 : i32
    %c0_i32_16 = arith.constant 0 : i32
    %26 = tpu.memref_slice %arg4[%c2_i32_15, %c0_i32_16] : memref<16x128xf32, #tpu.memory_space<vmem>> -> memref<1x128xf32, #tpu.memory_space<vmem>>
    %27 = tpu.memref_slice %arg5[%c2_i32_13] : memref<16x!tpu.dma_semaphore, #tpu.memory_space<semaphore_mem>> -> memref<1x!tpu.dma_semaphore, #tpu.memory_space<semaphore_mem>>
    %28 = tpu.memref_squeeze %27 : memref<1x!tpu.dma_semaphore, #tpu.memory_space<semaphore_mem>> -> memref<!tpu.dma_semaphore, #tpu.memory_space<semaphore_mem>>
    tpu.enqueue_dma source(%25 : memref<1x128xf32, #tpu.memory_space<any>>) target(%26 : memref<1x128xf32, #tpu.memory_space<vmem>>) target_semaphore(%28 : memref<!tpu.dma_semaphore, #tpu.memory_space<semaphore_mem>>)
    %c3_i32 = arith.constant 3 : i32
    %29 = arith.addi %1, %c3_i32 : i32
    %30 = arith.index_cast %29 : i32 to index
    %31 = memref.load %arg1[%30] : memref<16xi32, #tpu.memory_space<smem>>
    %c0_i32_17 = arith.constant 0 : i32
    %c63_i32_18 = arith.constant 63 : i32
    %32 = arith.maxsi %c0_i32_17, %31 : i32
    %33 = arith.minsi %c63_i32_18, %32 : i32
    %c3_i32_19 = arith.constant 3 : i32
    %c0_i32_20 = arith.constant 0 : i32
    %34 = tpu.memref_slice %arg2[%33, %c0_i32_20] : memref<64x128xf32, #tpu.memory_space<any>> -> memref<1x128xf32, #tpu.memory_space<any>>
    %c3_i32_21 = arith.constant 3 : i32
    %c0_i32_22 = arith.constant 0 : i32
    %35 = tpu.memref_slice %arg4[%c3_i32_21, %c0_i32_22] : memref<16x128xf32, #tpu.memory_space<vmem>> -> memref<1x128xf32, #tpu.memory_space<vmem>>
    %36 = tpu.memref_slice %arg5[%c3_i32_19] : memref<16x!tpu.dma_semaphore, #tpu.memory_space<semaphore_mem>> -> memref<1x!tpu.dma_semaphore, #tpu.memory_space<semaphore_mem>>
    %37 = tpu.memref_squeeze %36 : memref<1x!tpu.dma_semaphore, #tpu.memory_space<semaphore_mem>> -> memref<!tpu.dma_semaphore, #tpu.memory_space<semaphore_mem>>
    tpu.enqueue_dma source(%34 : memref<1x128xf32, #tpu.memory_space<any>>) target(%35 : memref<1x128xf32, #tpu.memory_space<vmem>>) target_semaphore(%37 : memref<!tpu.dma_semaphore, #tpu.memory_space<semaphore_mem>>)
    %c4_i32 = arith.constant 4 : i32
    %38 = arith.addi %1, %c4_i32 : i32
    %39 = arith.index_cast %38 : i32 to index
    %40 = memref.load %arg1[%39] : memref<16xi32, #tpu.memory_space<smem>>
    %c0_i32_23 = arith.constant 0 : i32
    %c63_i32_24 = arith.constant 63 : i32
    %41 = arith.maxsi %c0_i32_23, %40 : i32
    %42 = arith.minsi %c63_i32_24, %41 : i32
    %c4_i32_25 = arith.constant 4 : i32
    %c0_i32_26 = arith.constant 0 : i32
    %43 = tpu.memref_slice %arg2[%42, %c0_i32_26] : memref<64x128xf32, #tpu.memory_space<any>> -> memref<1x128xf32, #tpu.memory_space<any>>
    %c4_i32_27 = arith.constant 4 : i32
    %c0_i32_28 = arith.constant 0 : i32
    %44 = tpu.memref_slice %arg4[%c4_i32_27, %c0_i32_28] : memref<16x128xf32, #tpu.memory_space<vmem>> -> memref<1x128xf32, #tpu.memory_space<vmem>>
    %45 = tpu.memref_slice %arg5[%c4_i32_25] : memref<16x!tpu.dma_semaphore, #tpu.memory_space<semaphore_mem>> -> memref<1x!tpu.dma_semaphore, #tpu.memory_space<semaphore_mem>>
    %46 = tpu.memref_squeeze %45 : memref<1x!tpu.dma_semaphore, #tpu.memory_space<semaphore_mem>> -> memref<!tpu.dma_semaphore, #tpu.memory_space<semaphore_mem>>
    tpu.enqueue_dma source(%43 : memref<1x128xf32, #tpu.memory_space<any>>) target(%44 : memref<1x128xf32, #tpu.memory_space<vmem>>) target_semaphore(%46 : memref<!tpu.dma_semaphore, #tpu.memory_space<semaphore_mem>>)
    %c5_i32 = arith.constant 5 : i32
    %47 = arith.addi %1, %c5_i32 : i32
    %48 = arith.index_cast %47 : i32 to index
    %49 = memref.load %arg1[%48] : memref<16xi32, #tpu.memory_space<smem>>
    %c0_i32_29 = arith.constant 0 : i32
    %c63_i32_30 = arith.constant 63 : i32
    %50 = arith.maxsi %c0_i32_29, %49 : i32
    %51 = arith.minsi %c63_i32_30, %50 : i32
    %c5_i32_31 = arith.constant 5 : i32
    %c0_i32_32 = arith.constant 0 : i32
    %52 = tpu.memref_slice %arg2[%51, %c0_i32_32] : memref<64x128xf32, #tpu.memory_space<any>> -> memref<1x128xf32, #tpu.memory_space<any>>
    %c5_i32_33 = arith.constant 5 : i32
    %c0_i32_34 = arith.constant 0 : i32
    %53 = tpu.memref_slice %arg4[%c5_i32_33, %c0_i32_34] : memref<16x128xf32, #tpu.memory_space<vmem>> -> memref<1x128xf32, #tpu.memory_space<vmem>>
    %54 = tpu.memref_slice %arg5[%c5_i32_31] : memref<16x!tpu.dma_semaphore, #tpu.memory_space<semaphore_mem>> -> memref<1x!tpu.dma_semaphore, #tpu.memory_space<semaphore_mem>>
    %55 = tpu.memref_squeeze %54 : memref<1x!tpu.dma_semaphore, #tpu.memory_space<semaphore_mem>> -> memref<!tpu.dma_semaphore, #tpu.memory_space<semaphore_mem>>
    tpu.enqueue_dma source(%52 : memref<1x128xf32, #tpu.memory_space<any>>) target(%53 : memref<1x128xf32, #tpu.memory_space<vmem>>) target_semaphore(%55 : memref<!tpu.dma_semaphore, #tpu.memory_space<semaphore_mem>>)
    %c6_i32 = arith.constant 6 : i32
    %56 = arith.addi %1, %c6_i32 : i32
    %57 = arith.index_cast %56 : i32 to index
    %58 = memref.load %arg1[%57] : memref<16xi32, #tpu.memory_space<smem>>
    %c0_i32_35 = arith.constant 0 : i32
    %c63_i32_36 = arith.constant 63 : i32
    %59 = arith.maxsi %c0_i32_35, %58 : i32
    %60 = arith.minsi %c63_i32_36, %59 : i32
    %c6_i32_37 = arith.constant 6 : i32
    %c0_i32_38 = arith.constant 0 : i32
    %61 = tpu.memref_slice %arg2[%60, %c0_i32_38] : memref<64x128xf32, #tpu.memory_space<any>> -> memref<1x128xf32, #tpu.memory_space<any>>
    %c6_i32_39 = arith.constant 6 : i32
    %c0_i32_40 = arith.constant 0 : i32
    %62 = tpu.memref_slice %arg4[%c6_i32_39, %c0_i32_40] : memref<16x128xf32, #tpu.memory_space<vmem>> -> memref<1x128xf32, #tpu.memory_space<vmem>>
    %63 = tpu.memref_slice %arg5[%c6_i32_37] : memref<16x!tpu.dma_semaphore, #tpu.memory_space<semaphore_mem>> -> memref<1x!tpu.dma_semaphore, #tpu.memory_space<semaphore_mem>>
    %64 = tpu.memref_squeeze %63 : memref<1x!tpu.dma_semaphore, #tpu.memory_space<semaphore_mem>> -> memref<!tpu.dma_semaphore, #tpu.memory_space<semaphore_mem>>
    tpu.enqueue_dma source(%61 : memref<1x128xf32, #tpu.memory_space<any>>) target(%62 : memref<1x128xf32, #tpu.memory_space<vmem>>) target_semaphore(%64 : memref<!tpu.dma_semaphore, #tpu.memory_space<semaphore_mem>>)
    %c7_i32 = arith.constant 7 : i32
    %65 = arith.addi %1, %c7_i32 : i32
    %66 = arith.index_cast %65 : i32 to index
    %67 = memref.load %arg1[%66] : memref<16xi32, #tpu.memory_space<smem>>
    %c0_i32_41 = arith.constant 0 : i32
    %c63_i32_42 = arith.constant 63 : i32
    %68 = arith.maxsi %c0_i32_41, %67 : i32
    %69 = arith.minsi %c63_i32_42, %68 : i32
    %c7_i32_43 = arith.constant 7 : i32
    %c0_i32_44 = arith.constant 0 : i32
    %70 = tpu.memref_slice %arg2[%69, %c0_i32_44] : memref<64x128xf32, #tpu.memory_space<any>> -> memref<1x128xf32, #tpu.memory_space<any>>
    %c7_i32_45 = arith.constant 7 : i32
    %c0_i32_46 = arith.constant 0 : i32
    %71 = tpu.memref_slice %arg4[%c7_i32_45, %c0_i32_46] : memref<16x128xf32, #tpu.memory_space<vmem>> -> memref<1x128xf32, #tpu.memory_space<vmem>>
    %72 = tpu.memref_slice %arg5[%c7_i32_43] : memref<16x!tpu.dma_semaphore, #tpu.memory_space<semaphore_mem>> -> memref<1x!tpu.dma_semaphore, #tpu.memory_space<semaphore_mem>>
    %73 = tpu.memref_squeeze %72 : memref<1x!tpu.dma_semaphore, #tpu.memory_space<semaphore_mem>> -> memref<!tpu.dma_semaphore, #tpu.memory_space<semaphore_mem>>
    tpu.enqueue_dma source(%70 : memref<1x128xf32, #tpu.memory_space<any>>) target(%71 : memref<1x128xf32, #tpu.memory_space<vmem>>) target_semaphore(%73 : memref<!tpu.dma_semaphore, #tpu.memory_space<semaphore_mem>>)
    %c8_i32 = arith.constant 8 : i32
    %74 = arith.addi %1, %c8_i32 : i32
    %75 = arith.index_cast %74 : i32 to index
    %76 = memref.load %arg1[%75] : memref<16xi32, #tpu.memory_space<smem>>
    %c0_i32_47 = arith.constant 0 : i32
    %c63_i32_48 = arith.constant 63 : i32
    %77 = arith.maxsi %c0_i32_47, %76 : i32
    %78 = arith.minsi %c63_i32_48, %77 : i32
    %c8_i32_49 = arith.constant 8 : i32
    %c0_i32_50 = arith.constant 0 : i32
    %79 = tpu.memref_slice %arg2[%78, %c0_i32_50] : memref<64x128xf32, #tpu.memory_space<any>> -> memref<1x128xf32, #tpu.memory_space<any>>
    %c8_i32_51 = arith.constant 8 : i32
    %c0_i32_52 = arith.constant 0 : i32
    %80 = tpu.memref_slice %arg4[%c8_i32_51, %c0_i32_52] : memref<16x128xf32, #tpu.memory_space<vmem>> -> memref<1x128xf32, #tpu.memory_space<vmem>>
    %81 = tpu.memref_slice %arg5[%c8_i32_49] : memref<16x!tpu.dma_semaphore, #tpu.memory_space<semaphore_mem>> -> memref<1x!tpu.dma_semaphore, #tpu.memory_space<semaphore_mem>>
    %82 = tpu.memref_squeeze %81 : memref<1x!tpu.dma_semaphore, #tpu.memory_space<semaphore_mem>> -> memref<!tpu.dma_semaphore, #tpu.memory_space<semaphore_mem>>
    tpu.enqueue_dma source(%79 : memref<1x128xf32, #tpu.memory_space<any>>) target(%80 : memref<1x128xf32, #tpu.memory_space<vmem>>) target_semaphore(%82 : memref<!tpu.dma_semaphore, #tpu.memory_space<semaphore_mem>>)
    %c9_i32 = arith.constant 9 : i32
    %83 = arith.addi %1, %c9_i32 : i32
    %84 = arith.index_cast %83 : i32 to index
    %85 = memref.load %arg1[%84] : memref<16xi32, #tpu.memory_space<smem>>
    %c0_i32_53 = arith.constant 0 : i32
    %c63_i32_54 = arith.constant 63 : i32
    %86 = arith.maxsi %c0_i32_53, %85 : i32
    %87 = arith.minsi %c63_i32_54, %86 : i32
    %c9_i32_55 = arith.constant 9 : i32
    %c0_i32_56 = arith.constant 0 : i32
    %88 = tpu.memref_slice %arg2[%87, %c0_i32_56] : memref<64x128xf32, #tpu.memory_space<any>> -> memref<1x128xf32, #tpu.memory_space<any>>
    %c9_i32_57 = arith.constant 9 : i32
    %c0_i32_58 = arith.constant 0 : i32
    %89 = tpu.memref_slice %arg4[%c9_i32_57, %c0_i32_58] : memref<16x128xf32, #tpu.memory_space<vmem>> -> memref<1x128xf32, #tpu.memory_space<vmem>>
    %90 = tpu.memref_slice %arg5[%c9_i32_55] : memref<16x!tpu.dma_semaphore, #tpu.memory_space<semaphore_mem>> -> memref<1x!tpu.dma_semaphore, #tpu.memory_space<semaphore_mem>>
    %91 = tpu.memref_squeeze %90 : memref<1x!tpu.dma_semaphore, #tpu.memory_space<semaphore_mem>> -> memref<!tpu.dma_semaphore, #tpu.memory_space<semaphore_mem>>
    tpu.enqueue_dma source(%88 : memref<1x128xf32, #tpu.memory_space<any>>) target(%89 : memref<1x128xf32, #tpu.memory_space<vmem>>) target_semaphore(%91 : memref<!tpu.dma_semaphore, #tpu.memory_space<semaphore_mem>>)
    %c10_i32 = arith.constant 10 : i32
    %92 = arith.addi %1, %c10_i32 : i32
    %93 = arith.index_cast %92 : i32 to index
    %94 = memref.load %arg1[%93] : memref<16xi32, #tpu.memory_space<smem>>
    %c0_i32_59 = arith.constant 0 : i32
    %c63_i32_60 = arith.constant 63 : i32
    %95 = arith.maxsi %c0_i32_59, %94 : i32
    %96 = arith.minsi %c63_i32_60, %95 : i32
    %c10_i32_61 = arith.constant 10 : i32
    %c0_i32_62 = arith.constant 0 : i32
    %97 = tpu.memref_slice %arg2[%96, %c0_i32_62] : memref<64x128xf32, #tpu.memory_space<any>> -> memref<1x128xf32, #tpu.memory_space<any>>
    %c10_i32_63 = arith.constant 10 : i32
    %c0_i32_64 = arith.constant 0 : i32
    %98 = tpu.memref_slice %arg4[%c10_i32_63, %c0_i32_64] : memref<16x128xf32, #tpu.memory_space<vmem>> -> memref<1x128xf32, #tpu.memory_space<vmem>>
    %99 = tpu.memref_slice %arg5[%c10_i32_61] : memref<16x!tpu.dma_semaphore, #tpu.memory_space<semaphore_mem>> -> memref<1x!tpu.dma_semaphore, #tpu.memory_space<semaphore_mem>>
    %100 = tpu.memref_squeeze %99 : memref<1x!tpu.dma_semaphore, #tpu.memory_space<semaphore_mem>> -> memref<!tpu.dma_semaphore, #tpu.memory_space<semaphore_mem>>
    tpu.enqueue_dma source(%97 : memref<1x128xf32, #tpu.memory_space<any>>) target(%98 : memref<1x128xf32, #tpu.memory_space<vmem>>) target_semaphore(%100 : memref<!tpu.dma_semaphore, #tpu.memory_space<semaphore_mem>>)
    %c11_i32 = arith.constant 11 : i32
    %101 = arith.addi %1, %c11_i32 : i32
    %102 = arith.index_cast %101 : i32 to index
    %103 = memref.load %arg1[%102] : memref<16xi32, #tpu.memory_space<smem>>
    %c0_i32_65 = arith.constant 0 : i32
    %c63_i32_66 = arith.constant 63 : i32
    %104 = arith.maxsi %c0_i32_65, %103 : i32
    %105 = arith.minsi %c63_i32_66, %104 : i32
    %c11_i32_67 = arith.constant 11 : i32
    %c0_i32_68 = arith.constant 0 : i32
    %106 = tpu.memref_slice %arg2[%105, %c0_i32_68] : memref<64x128xf32, #tpu.memory_space<any>> -> memref<1x128xf32, #tpu.memory_space<any>>
    %c11_i32_69 = arith.constant 11 : i32
    %c0_i32_70 = arith.constant 0 : i32
    %107 = tpu.memref_slice %arg4[%c11_i32_69, %c0_i32_70] : memref<16x128xf32, #tpu.memory_space<vmem>> -> memref<1x128xf32, #tpu.memory_space<vmem>>
    %108 = tpu.memref_slice %arg5[%c11_i32_67] : memref<16x!tpu.dma_semaphore, #tpu.memory_space<semaphore_mem>> -> memref<1x!tpu.dma_semaphore, #tpu.memory_space<semaphore_mem>>
    %109 = tpu.memref_squeeze %108 : memref<1x!tpu.dma_semaphore, #tpu.memory_space<semaphore_mem>> -> memref<!tpu.dma_semaphore, #tpu.memory_space<semaphore_mem>>
    tpu.enqueue_dma source(%106 : memref<1x128xf32, #tpu.memory_space<any>>) target(%107 : memref<1x128xf32, #tpu.memory_space<vmem>>) target_semaphore(%109 : memref<!tpu.dma_semaphore, #tpu.memory_space<semaphore_mem>>)
    %c12_i32 = arith.constant 12 : i32
    %110 = arith.addi %1, %c12_i32 : i32
    %111 = arith.index_cast %110 : i32 to index
    %112 = memref.load %arg1[%111] : memref<16xi32, #tpu.memory_space<smem>>
    %c0_i32_71 = arith.constant 0 : i32
    %c63_i32_72 = arith.constant 63 : i32
    %113 = arith.maxsi %c0_i32_71, %112 : i32
    %114 = arith.minsi %c63_i32_72, %113 : i32
    %c12_i32_73 = arith.constant 12 : i32
    %c0_i32_74 = arith.constant 0 : i32
    %115 = tpu.memref_slice %arg2[%114, %c0_i32_74] : memref<64x128xf32, #tpu.memory_space<any>> -> memref<1x128xf32, #tpu.memory_space<any>>
    %c12_i32_75 = arith.constant 12 : i32
    %c0_i32_76 = arith.constant 0 : i32
    %116 = tpu.memref_slice %arg4[%c12_i32_75, %c0_i32_76] : memref<16x128xf32, #tpu.memory_space<vmem>> -> memref<1x128xf32, #tpu.memory_space<vmem>>
    %117 = tpu.memref_slice %arg5[%c12_i32_73] : memref<16x!tpu.dma_semaphore, #tpu.memory_space<semaphore_mem>> -> memref<1x!tpu.dma_semaphore, #tpu.memory_space<semaphore_mem>>
    %118 = tpu.memref_squeeze %117 : memref<1x!tpu.dma_semaphore, #tpu.memory_space<semaphore_mem>> -> memref<!tpu.dma_semaphore, #tpu.memory_space<semaphore_mem>>
    tpu.enqueue_dma source(%115 : memref<1x128xf32, #tpu.memory_space<any>>) target(%116 : memref<1x128xf32, #tpu.memory_space<vmem>>) target_semaphore(%118 : memref<!tpu.dma_semaphore, #tpu.memory_space<semaphore_mem>>)
    %c13_i32 = arith.constant 13 : i32
    %119 = arith.addi %1, %c13_i32 : i32
    %120 = arith.index_cast %119 : i32 to index
    %121 = memref.load %arg1[%120] : memref<16xi32, #tpu.memory_space<smem>>
    %c0_i32_77 = arith.constant 0 : i32
    %c63_i32_78 = arith.constant 63 : i32
    %122 = arith.maxsi %c0_i32_77, %121 : i32
    %123 = arith.minsi %c63_i32_78, %122 : i32
    %c13_i32_79 = arith.constant 13 : i32
    %c0_i32_80 = arith.constant 0 : i32
    %124 = tpu.memref_slice %arg2[%123, %c0_i32_80] : memref<64x128xf32, #tpu.memory_space<any>> -> memref<1x128xf32, #tpu.memory_space<any>>
    %c13_i32_81 = arith.constant 13 : i32
    %c0_i32_82 = arith.constant 0 : i32
    %125 = tpu.memref_slice %arg4[%c13_i32_81, %c0_i32_82] : memref<16x128xf32, #tpu.memory_space<vmem>> -> memref<1x128xf32, #tpu.memory_space<vmem>>
    %126 = tpu.memref_slice %arg5[%c13_i32_79] : memref<16x!tpu.dma_semaphore, #tpu.memory_space<semaphore_mem>> -> memref<1x!tpu.dma_semaphore, #tpu.memory_space<semaphore_mem>>
    %127 = tpu.memref_squeeze %126 : memref<1x!tpu.dma_semaphore, #tpu.memory_space<semaphore_mem>> -> memref<!tpu.dma_semaphore, #tpu.memory_space<semaphore_mem>>
    tpu.enqueue_dma source(%124 : memref<1x128xf32, #tpu.memory_space<any>>) target(%125 : memref<1x128xf32, #tpu.memory_space<vmem>>) target_semaphore(%127 : memref<!tpu.dma_semaphore, #tpu.memory_space<semaphore_mem>>)
    %c14_i32 = arith.constant 14 : i32
    %128 = arith.addi %1, %c14_i32 : i32
    %129 = arith.index_cast %128 : i32 to index
    %130 = memref.load %arg1[%129] : memref<16xi32, #tpu.memory_space<smem>>
    %c0_i32_83 = arith.constant 0 : i32
    %c63_i32_84 = arith.constant 63 : i32
    %131 = arith.maxsi %c0_i32_83, %130 : i32
    %132 = arith.minsi %c63_i32_84, %131 : i32
    %c14_i32_85 = arith.constant 14 : i32
    %c0_i32_86 = arith.constant 0 : i32
    %133 = tpu.memref_slice %arg2[%132, %c0_i32_86] : memref<64x128xf32, #tpu.memory_space<any>> -> memref<1x128xf32, #tpu.memory_space<any>>
    %c14_i32_87 = arith.constant 14 : i32
    %c0_i32_88 = arith.constant 0 : i32
    %134 = tpu.memref_slice %arg4[%c14_i32_87, %c0_i32_88] : memref<16x128xf32, #tpu.memory_space<vmem>> -> memref<1x128xf32, #tpu.memory_space<vmem>>
    %135 = tpu.memref_slice %arg5[%c14_i32_85] : memref<16x!tpu.dma_semaphore, #tpu.memory_space<semaphore_mem>> -> memref<1x!tpu.dma_semaphore, #tpu.memory_space<semaphore_mem>>
    %136 = tpu.memref_squeeze %135 : memref<1x!tpu.dma_semaphore, #tpu.memory_space<semaphore_mem>> -> memref<!tpu.dma_semaphore, #tpu.memory_space<semaphore_mem>>
    tpu.enqueue_dma source(%133 : memref<1x128xf32, #tpu.memory_space<any>>) target(%134 : memref<1x128xf32, #tpu.memory_space<vmem>>) target_semaphore(%136 : memref<!tpu.dma_semaphore, #tpu.memory_space<semaphore_mem>>)
    %c15_i32 = arith.constant 15 : i32
    %137 = arith.addi %1, %c15_i32 : i32
    %138 = arith.index_cast %137 : i32 to index
    %139 = memref.load %arg1[%138] : memref<16xi32, #tpu.memory_space<smem>>
    %c0_i32_89 = arith.constant 0 : i32
    %c63_i32_90 = arith.constant 63 : i32
    %140 = arith.maxsi %c0_i32_89, %139 : i32
    %141 = arith.minsi %c63_i32_90, %140 : i32
    %c15_i32_91 = arith.constant 15 : i32
    %c0_i32_92 = arith.constant 0 : i32
    %142 = tpu.memref_slice %arg2[%141, %c0_i32_92] : memref<64x128xf32, #tpu.memory_space<any>> -> memref<1x128xf32, #tpu.memory_space<any>>
    %c15_i32_93 = arith.constant 15 : i32
    %c0_i32_94 = arith.constant 0 : i32
    %143 = tpu.memref_slice %arg4[%c15_i32_93, %c0_i32_94] : memref<16x128xf32, #tpu.memory_space<vmem>> -> memref<1x128xf32, #tpu.memory_space<vmem>>
    %144 = tpu.memref_slice %arg5[%c15_i32_91] : memref<16x!tpu.dma_semaphore, #tpu.memory_space<semaphore_mem>> -> memref<1x!tpu.dma_semaphore, #tpu.memory_space<semaphore_mem>>
    %145 = tpu.memref_squeeze %144 : memref<1x!tpu.dma_semaphore, #tpu.memory_space<semaphore_mem>> -> memref<!tpu.dma_semaphore, #tpu.memory_space<semaphore_mem>>
    tpu.enqueue_dma source(%142 : memref<1x128xf32, #tpu.memory_space<any>>) target(%143 : memref<1x128xf32, #tpu.memory_space<vmem>>) target_semaphore(%145 : memref<!tpu.dma_semaphore, #tpu.memory_space<semaphore_mem>>)
    %c0_i32_95 = arith.constant 0 : i32
    %c16_i32_96 = arith.constant 16 : i32
    %146 = arith.addi %c0_i32_95, %c16_i32_96 : i32
    %c1_i32_97 = arith.constant 1 : i32
    scf.for %arg6 = %c0_i32_95 to %146 step %c1_i32_97  : i32 {
      %c1_i32_102 = arith.constant 1 : i32
      %151 = arith.muli %arg6, %c1_i32_102 : i32
      %c0_i32_103 = arith.constant 0 : i32
      %152 = arith.addi %c0_i32_103, %151 : i32
      %c16_i32_104 = arith.constant 16 : i32
      %c0_i32_105 = arith.constant 0 : i32
      %153 = arith.cmpi eq, %c16_i32_104, %c0_i32_105 : i32
      %c1_i32_106 = arith.constant 1 : i32
      %154 = arith.select %153, %c1_i32_106, %c16_i32_104 : i32
      %155 = arith.remsi %152, %154 : i32
      %c0_i32_107 = arith.constant 0 : i32
      %156 = arith.cmpi ne, %155, %c0_i32_107 : i32
      %c0_i32_108 = arith.constant 0 : i32
      %157 = arith.cmpi slt, %155, %c0_i32_108 : i32
      %c0_i32_109 = arith.constant 0 : i32
      %158 = arith.cmpi slt, %154, %c0_i32_109 : i32
      %159 = arith.xori %157, %158 : i1
      %160 = arith.andi %159, %156 : i1
      %161 = arith.addi %155, %154 : i32
      %162 = arith.select %160, %161, %155 : i32
      %c0_i32_110 = arith.constant 0 : i32
      %c0_i32_111 = arith.constant 0 : i32
      %163 = tpu.memref_slice %arg2[%c0_i32_110, %c0_i32_111] : memref<64x128xf32, #tpu.memory_space<any>> -> memref<1x128xf32, #tpu.memory_space<any>>
      %c0_i32_112 = arith.constant 0 : i32
      %164 = tpu.memref_slice %arg4[%152, %c0_i32_112] : memref<16x128xf32, #tpu.memory_space<vmem>> -> memref<1x128xf32, #tpu.memory_space<vmem>>
      %165 = tpu.memref_slice %arg5[%162] : memref<16x!tpu.dma_semaphore, #tpu.memory_space<semaphore_mem>> -> memref<1x!tpu.dma_semaphore, #tpu.memory_space<semaphore_mem>>
      %166 = tpu.memref_squeeze %165 : memref<1x!tpu.dma_semaphore, #tpu.memory_space<semaphore_mem>> -> memref<!tpu.dma_semaphore, #tpu.memory_space<semaphore_mem>>
      tpu.wait_dma2 semaphore(%166 : memref<!tpu.dma_semaphore, #tpu.memory_space<semaphore_mem>>) src(%163 : memref<1x128xf32, #tpu.memory_space<any>>) dst(%164 : memref<1x128xf32, #tpu.memory_space<vmem>>)
      %c16_i32_113 = arith.constant 16 : i32
      %167 = arith.addi %152, %c16_i32_113 : i32
      %c16_i32_114 = arith.constant 16 : i32
      %168 = arith.cmpi slt, %167, %c16_i32_114 : i32
      %169 = arith.extui %168 : i1 to i32
      %c0_i32_115 = arith.constant 0 : i32
      %170 = arith.cmpi ne, %169, %c0_i32_115 : i32
      scf.if %170 {
        %c16_i32_116 = arith.constant 16 : i32
        %171 = arith.addi %152, %c16_i32_116 : i32
        %172 = arith.addi %1, %171 : i32
        %173 = arith.index_cast %172 : i32 to index
        %174 = memref.load %arg1[%173] : memref<16xi32, #tpu.memory_space<smem>>
        %c0_i32_117 = arith.constant 0 : i32
        %c63_i32_118 = arith.constant 63 : i32
        %175 = arith.maxsi %c0_i32_117, %174 : i32
        %176 = arith.minsi %c63_i32_118, %175 : i32
        %c0_i32_119 = arith.constant 0 : i32
        %177 = tpu.memref_slice %arg2[%176, %c0_i32_119] : memref<64x128xf32, #tpu.memory_space<any>> -> memref<1x128xf32, #tpu.memory_space<any>>
        %c0_i32_120 = arith.constant 0 : i32
        %178 = tpu.memref_slice %arg4[%171, %c0_i32_120] : memref<16x128xf32, #tpu.memory_space<vmem>> -> memref<1x128xf32, #tpu.memory_space<vmem>>
        %179 = tpu.memref_slice %arg5[%162] : memref<16x!tpu.dma_semaphore, #tpu.memory_space<semaphore_mem>> -> memref<1x!tpu.dma_semaphore, #tpu.memory_space<semaphore_mem>>
        %180 = tpu.memref_squeeze %179 : memref<1x!tpu.dma_semaphore, #tpu.memory_space<semaphore_mem>> -> memref<!tpu.dma_semaphore, #tpu.memory_space<semaphore_mem>>
        tpu.enqueue_dma source(%177 : memref<1x128xf32, #tpu.memory_space<any>>) target(%178 : memref<1x128xf32, #tpu.memory_space<vmem>>) target_semaphore(%180 : memref<!tpu.dma_semaphore, #tpu.memory_space<semaphore_mem>>)
      } else {
      }
    }
    %c16_i32_98 = arith.constant 16 : i32
    %c0 = arith.constant 0 : index
    %c0_99 = arith.constant 0 : index
    %147 = vector.load %arg4[%c0, %c0_99] : memref<16x128xf32, #tpu.memory_space<vmem>>, vector<16x128xf32>
    %cst = arith.constant 11.3137083 : f32
    %148 = vector.broadcast %cst : f32 to vector<16x128xf32>
    %149 = arith.mulf %147, %148 : vector<16x128xf32>
    %c0_100 = arith.constant 0 : index
    %c0_101 = arith.constant 0 : index
    %150 = vector.load %arg3[%c0_100, %c0_101] : memref<16x128xf32, #tpu.memory_space<vmem>>, vector<16x128xf32>
    tpu.vector_store %arg3[%c0_100, %c0_101], %149 {strides = array<i32>} : memref<16x128xf32, #tpu.memory_space<vmem>>, vector<16x128xf32>,
    return
  }
  func.func @transform_1(%arg0: i32, %arg1: memref<16xi32, #tpu.memory_space<smem>>) -> (i32, i32) {
    %c0_i32 = arith.constant 0 : i32
    %c0_i32_0 = arith.constant 0 : i32
    return %arg0, %c0_i32 : i32, i32
  }
}

</mosaic_0001>

<llo_original>
// kernel: tpu_custom_call.1
$region0: #{tpu_custom_call.1}
  #allocation0 [shape = 'u32[]', space=smem, size = 0x4, offset = 0x4, fixed_abs, tag = 'smem constant byte address 0x4 - core index']
  #allocation1 [shape = 'u32[72,128]{1,0:T(1,128)}', space=vmem, size = 0x9000, scoped, tag = 'internal scratch']
  #allocation2 [shape = 'f32[16,128]{1,0:T(8,128)}', space=vmem, size = 0x2000, scoped, tag = 'scratch operand']
  #allocation3 [shape = 's32[16]{0}', space=sflag, size = 0x40, scoped, tag = 'scratch operand']
  #allocation4 [shape = 's32[1]{0}', space=sflag, size = 0x4, scoped, tag = 'scoped memory for tpu_custom_call.1']
  #allocation5 [shape = 'u8[512]{0}', space=smem, size = 0x200, scoped, tag = 'prefetched SMEM operand 0']
  #allocation8 [shape = 's32[]', space=sflag, size = 0x4, offset = 0, fixed_abs, tag = 'sflag constant byte address 0x0 - dummy sync flag']
  #allocation9 [shape = 's32[]', space=sflag, size = 0x4, offset = 0, fixed_abs, tag = 'sflag constant byte address 0x0 - dummy sync flag']
  #allocation10 [shape = 'u32[]', space=smem, size = 0x4, offset = 0x44, fixed_abs, tag = 'smem constant byte address 0x44 - assertion arg 0']
  #allocation11 [shape = 'u32[]', space=smem, size = 0x4, offset = 0x48, fixed_abs, tag = 'smem constant byte address 0x48 - assertion arg 1']
  #allocation12 [shape = 's32[]', space=sflag, size = 0x4, offset = 0, fixed_abs, tag = 'sflag constant byte address 0x0 - dummy sync flag']
  #allocation13 [shape = 's32[]', space=sflag, size = 0x4, offset = 0, fixed_abs, tag = 'sflag constant byte address 0x0 - dummy sync flag']
  #allocation14 [shape = 's32[]', space=sflag, size = 0x4, offset = 0, fixed_abs, tag = 'sflag constant byte address 0x0 - dummy sync flag']
  #allocation15 [shape = 's32[]', space=sflag, size = 0x4, offset = 0, fixed_abs, tag = 'sflag constant byte address 0x0 - dummy sync flag']
  #allocation16 [shape = 's32[]', space=sflag, size = 0x4, offset = 0, fixed_abs, tag = 'sflag constant byte address 0x0 - dummy sync flag']
  #allocation17 [shape = 's32[]', space=sflag, size = 0x4, offset = 0, fixed_abs, tag = 'sflag constant byte address 0x0 - dummy sync flag']
  #allocation18 [shape = 's32[]', space=sflag, size = 0x4, offset = 0, fixed_abs, tag = 'sflag constant byte address 0x0 - dummy sync flag']
  #allocation19 [shape = 's32[]', space=sflag, size = 0x4, offset = 0, fixed_abs, tag = 'sflag constant byte address 0x0 - dummy sync flag']
  #allocation20 [shape = 's32[]', space=sflag, size = 0x4, offset = 0, fixed_abs, tag = 'sflag constant byte address 0x0 - dummy sync flag']
  #allocation21 [shape = 's32[]', space=sflag, size = 0x4, offset = 0, fixed_abs, tag = 'sflag constant byte address 0x0 - dummy sync flag']
  #allocation22 [shape = 's32[]', space=sflag, size = 0x4, offset = 0, fixed_abs, tag = 'sflag constant byte address 0x0 - dummy sync flag']
  #allocation23 [shape = 's32[]', space=sflag, size = 0x4, offset = 0, fixed_abs, tag = 'sflag constant byte address 0x0 - dummy sync flag']
  #allocation24 [shape = 's32[]', space=sflag, size = 0x4, offset = 0, fixed_abs, tag = 'sflag constant byte address 0x0 - dummy sync flag']
  #allocation25 [shape = 's32[]', space=sflag, size = 0x4, offset = 0, fixed_abs, tag = 'sflag constant byte address 0x0 - dummy sync flag']
  #allocation26 [shape = 's32[]', space=sflag, size = 0x4, offset = 0, fixed_abs, tag = 'sflag constant byte address 0x0 - dummy sync flag']
  #allocation27 [shape = 's32[]', space=sflag, size = 0x4, offset = 0, fixed_abs, tag = 'sflag constant byte address 0x0 - dummy sync flag']
  #allocation28 [shape = 's32[]', space=sflag, size = 0x4, offset = 0, fixed_abs, tag = 'sflag constant byte address 0x0 - dummy sync flag']
  #allocation29 [shape = 's32[]', space=sflag, size = 0x4, offset = 0, fixed_abs, tag = 'sflag constant byte address 0x0 - dummy sync flag']
  #allocation30 [shape = 's32[]', space=sflag, size = 0x4, offset = 0, fixed_abs, tag = 'sflag constant byte address 0x0 - dummy sync flag']
  #allocation31 [shape = 's32[]', space=sflag, size = 0x4, offset = 0, fixed_abs, tag = 'sflag constant byte address 0x0 - dummy sync flag']
  #allocation32 [shape = 's32[]', space=sflag, size = 0x4, offset = 0, fixed_abs, tag = 'sflag constant byte address 0x0 - dummy sync flag']
  #allocation33 [shape = 's32[]', space=sflag, size = 0x4, offset = 0, fixed_abs, tag = 'sflag constant byte address 0x0 - dummy sync flag']
  #allocation34 [shape = 's32[]', space=sflag, size = 0x4, offset = 0, fixed_abs, tag = 'sflag constant byte address 0x0 - dummy sync flag']
  #allocation35 [shape = 's32[]', space=sflag, size = 0x4, offset = 0, fixed_abs, tag = 'sflag constant byte address 0x0 - dummy sync flag']
  #allocation36 [shape = 's32[]', space=sflag, size = 0x4, offset = 0, fixed_abs, tag = 'sflag constant byte address 0x0 - dummy sync flag']
  #allocation37 [shape = 's32[]', space=sflag, size = 0x4, offset = 0, fixed_abs, tag = 'sflag constant byte address 0x0 - dummy sync flag']
  #allocation38 [shape = 's32[]', space=sflag, size = 0x4, offset = 0, fixed_abs, tag = 'sflag constant byte address 0x0 - dummy sync flag']
  #allocation39 [shape = 's32[]', space=sflag, size = 0x4, offset = 0, fixed_abs, tag = 'sflag constant byte address 0x0 - dummy sync flag']
  #allocation40 [shape = 's32[]', space=sflag, size = 0x4, offset = 0, fixed_abs, tag = 'sflag constant byte address 0x0 - dummy sync flag']
  #allocation41 [shape = 's32[]', space=sflag, size = 0x4, offset = 0, fixed_abs, tag = 'sflag constant byte address 0x0 - dummy sync flag']
  #allocation42 [shape = 's32[]', space=sflag, size = 0x4, offset = 0, fixed_abs, tag = 'sflag constant byte address 0x0 - dummy sync flag']
  #allocation43 [shape = 's32[]', space=sflag, size = 0x4, offset = 0, fixed_abs, tag = 'sflag constant byte address 0x0 - dummy sync flag']
  %s0 = inlined_call_operand.hbm [shape: s32[16], index: 0, kind: input, shape index: {}]
  %s1 = inlined_call_operand.hbm [shape: f32[64,128], index: 1, kind: input, shape index: {}]
  %s2 = inlined_call_operand.hbm [shape: f32[16,128], index: 2, kind: output, shape index: {}]
  %s3 = sld [smem:[#allocation0]]
  $region89: #{tpu_custom_call.1} parent=0
    _
  %s5 = ssub.s32 1, %s3
  %s6 = scalar_select 0, %s5, %s3
  %s8 = sshll.u32 %s0, 4
  %s9 = int_to_ptr.hbm [resolvable:$true] %s8
  %11 = dma.hbm_to_smem %s9, 16, [#allocation5], [#allocation4]
  %13 = dma.done [#allocation4], 16
  %14 = sfence
  $region1: #{tpu_custom_call.1} parent=0
    #allocation6 [shape = 'u8[8192]{0}', space=vmem, size = 0x2000, scoped, tag = 'output window, operand 0, single buffered']
    #allocation7 [shape = 's32[1]{0}', space=sflag, size = 0x4, scoped, tag = 'scoped memory for tpu_custom_call.1']
    %15 = vsyncpa [#allocation7], 0
    %s16 = smul.u32 0, 16
    %s17 = sld [smem:[#allocation5 + %s16]]
    %p18 = scmp.gt.s32.totalorder %s17, 0
    %s19 = scalar_select %p18, %s17, 0
    %p20 = scmp.lt.s32.totalorder %s19, 63
    %s21 = scalar_select %p20, %s19, 63
    %s22 = scalar_lea.hbm %s1, %s21
    // Predicated region
    $region2: #{tpu_custom_call.1} parent=1 // pred_check
      _
    $region3: #{tpu_custom_call.1} parent=1 // pred_check_branch
      %24 = sbr.rel target = $region5
    $region4: #{tpu_custom_call.1} parent=1 // pred_region
      %25 = sst [smem:[#allocation10]] [#allocation9]
      %26 = sst [smem:[#allocation11]] [#allocation8]
    $region5: #{tpu_custom_call.1} parent=1 // pred_fallthru
      _
    %28 = shalt.err (0)
    %s30 = sshll.u32 %s22, 4
    %s31 = int_to_ptr.hbm [resolvable:$true] %s30
    %s32 = sshll.u32 [#allocation2], 4
    %s33 = int_to_ptr.vmem [resolvable:$true] %s32
    %35 = dma.hbm_to_vmem [thread:$0]  %s31, 16, %s33, [#allocation3]
    %s36 = sadd.s32 %s16, 1
    %s37 = sld [smem:[#allocation5 + %s36]]
    %p38 = scmp.gt.s32.totalorder %s37, 0
    %s39 = scalar_select %p38, %s37, 0
    %p40 = scmp.lt.s32.totalorder %s39, 63
    %s41 = scalar_select %p40, %s39, 63
    %s42 = scalar_lea.hbm %s1, %s41
    %s43 = scalar_lea.vmem [#allocation2], 1
    %s44 = scalar_lea.sflag [#allocation3], 1
    // Predicated region
    $region6: #{tpu_custom_call.1} parent=1 // pred_check
      _
    $region7: #{tpu_custom_call.1} parent=1 // pred_check_branch
      %46 = sbr.rel target = $region9
    $region8: #{tpu_custom_call.1} parent=1 // pred_region
      %47 = sst [smem:[#allocation10]] [#allocation13]
      %48 = sst [smem:[#allocation11]] [#allocation12]
    $region9: #{tpu_custom_call.1} parent=1 // pred_fallthru
      _
    %50 = shalt.err (0)
    %s52 = sshll.u32 %s42, 4
    %s53 = int_to_ptr.hbm [resolvable:$true] %s52
    %s54 = sshll.u32 %s43, 4
    %s55 = int_to_ptr.vmem [resolvable:$true] %s54
    %57 = dma.hbm_to_vmem [thread:$0]  %s53, 16, %s55, %s44
    %s58 = sadd.s32 %s16, 2
    %s59 = sld [smem:[#allocation5 + %s58]]
    %p60 = scmp.gt.s32.totalorder %s59, 0
    %s61 = scalar_select %p60, %s59, 0
    %p62 = scmp.lt.s32.totalorder %s61, 63
    %s63 = scalar_select %p62, %s61, 63
    %s64 = scalar_lea.hbm %s1, %s63
    %s65 = scalar_lea.vmem [#allocation2], 2
    %s66 = scalar_lea.sflag [#allocation3], 2
    // Predicated region
    $region10: #{tpu_custom_call.1} parent=1 // pred_check
      _
    $region11: #{tpu_custom_call.1} parent=1 // pred_check_branch
      %68 = sbr.rel target = $region13
    $region12: #{tpu_custom_call.1} parent=1 // pred_region
      %69 = sst [smem:[#allocation10]] [#allocation15]
      %70 = sst [smem:[#allocation11]] [#allocation14]
    $region13: #{tpu_custom_call.1} parent=1 // pred_fallthru
      _
    %72 = shalt.err (0)
    %s74 = sshll.u32 %s64, 4
    %s75 = int_to_ptr.hbm [resolvable:$true] %s74
    %s76 = sshll.u32 %s65, 4
    %s77 = int_to_ptr.vmem [resolvable:$true] %s76
    %79 = dma.hbm_to_vmem [thread:$0]  %s75, 16, %s77, %s66
    %s80 = sadd.s32 %s16, 3
    %s81 = sld [smem:[#allocation5 + %s80]]
    %p82 = scmp.gt.s32.totalorder %s81, 0
    %s83 = scalar_select %p82, %s81, 0
    %p84 = scmp.lt.s32.totalorder %s83, 63
    %s85 = scalar_select %p84, %s83, 63
    %s86 = scalar_lea.hbm %s1, %s85
    %s87 = scalar_lea.vmem [#allocation2], 3
    %s88 = scalar_lea.sflag [#allocation3], 3
    // Predicated region
    $region14: #{tpu_custom_call.1} parent=1 // pred_check
      _
    $region15: #{tpu_custom_call.1} parent=1 // pred_check_branch
      %90 = sbr.rel target = $region17
    $region16: #{tpu_custom_call.1} parent=1 // pred_region
      %91 = sst [smem:[#allocation10]] [#allocation17]
      %92 = sst [smem:[#allocation11]] [#allocation16]
    $region17: #{tpu_custom_call.1} parent=1 // pred_fallthru
      _
    %94 = shalt.err (0)
    %s96 = sshll.u32 %s86, 4
    %s97 = int_to_ptr.hbm [resolvable:$true] %s96
    %s98 = sshll.u32 %s87, 4
    %s99 = int_to_ptr.vmem [resolvable:$true] %s98
    %101 = dma.hbm_to_vmem [thread:$0]  %s97, 16, %s99, %s88
    %s102 = sadd.s32 %s16, 4
    %s103 = sld [smem:[#allocation5 + %s102]]
    %p104 = scmp.gt.s32.totalorder %s103, 0
    %s105 = scalar_select %p104, %s103, 0
    %p106 = scmp.lt.s32.totalorder %s105, 63
    %s107 = scalar_select %p106, %s105, 63
    %s108 = scalar_lea.hbm %s1, %s107
    %s109 = scalar_lea.vmem [#allocation2], 4
    %s110 = scalar_lea.sflag [#allocation3], 4
    // Predicated region
    $region18: #{tpu_custom_call.1} parent=1 // pred_check
      _
    $region19: #{tpu_custom_call.1} parent=1 // pred_check_branch
      %112 = sbr.rel target = $region21
    $region20: #{tpu_custom_call.1} parent=1 // pred_region
      %113 = sst [smem:[#allocation10]] [#allocation19]
      %114 = sst [smem:[#allocation11]] [#allocation18]
    $region21: #{tpu_custom_call.1} parent=1 // pred_fallthru
      _
    %116 = shalt.err (0)
    %s118 = sshll.u32 %s108, 4
    %s119 = int_to_ptr.hbm [resolvable:$true] %s118
    %s120 = sshll.u32 %s109, 4
    %s121 = int_to_ptr.vmem [resolvable:$true] %s120
    %123 = dma.hbm_to_vmem [thread:$0]  %s119, 16, %s121, %s110
    %s124 = sadd.s32 %s16, 5
    %s125 = sld [smem:[#allocation5 + %s124]]
    %p126 = scmp.gt.s32.totalorder %s125, 0
    %s127 = scalar_select %p126, %s125, 0
    %p128 = scmp.lt.s32.totalorder %s127, 63
    %s129 = scalar_select %p128, %s127, 63
    %s130 = scalar_lea.hbm %s1, %s129
    %s131 = scalar_lea.vmem [#allocation2], 5
    %s132 = scalar_lea.sflag [#allocation3], 5
    // Predicated region
    $region22: #{tpu_custom_call.1} parent=1 // pred_check
      _
    $region23: #{tpu_custom_call.1} parent=1 // pred_check_branch
      %134 = sbr.rel target = $region25
    $region24: #{tpu_custom_call.1} parent=1 // pred_region
      %135 = sst [smem:[#allocation10]] [#allocation21]
      %136 = sst [smem:[#allocation11]] [#allocation20]
    $region25: #{tpu_custom_call.1} parent=1 // pred_fallthru
      _
    %138 = shalt.err (0)
    %s140 = sshll.u32 %s130, 4
    %s141 = int_to_ptr.hbm [resolvable:$true] %s140
    %s142 = sshll.u32 %s131, 4
    %s143 = int_to_ptr.vmem [resolvable:$true] %s142
    %145 = dma.hbm_to_vmem [thread:$0]  %s141, 16, %s143, %s132
    %s146 = sadd.s32 %s16, 6
    %s147 = sld [smem:[#allocation5 + %s146]]
    %p148 = scmp.gt.s32.totalorder %s147, 0
    %s149 = scalar_select %p148, %s147, 0
    %p150 = scmp.lt.s32.totalorder %s149, 63
    %s151 = scalar_select %p150, %s149, 63
    %s152 = scalar_lea.hbm %s1, %s151
    %s153 = scalar_lea.vmem [#allocation2], 6
    %s154 = scalar_lea.sflag [#allocation3], 6
    // Predicated region
    $region26: #{tpu_custom_call.1} parent=1 // pred_check
      _
    $region27: #{tpu_custom_call.1} parent=1 // pred_check_branch
      %156 = sbr.rel target = $region29
    $region28: #{tpu_custom_call.1} parent=1 // pred_region
      %157 = sst [smem:[#allocation10]] [#allocation23]
      %158 = sst [smem:[#allocation11]] [#allocation22]
    $region29: #{tpu_custom_call.1} parent=1 // pred_fallthru
      _
    %160 = shalt.err (0)
    %s162 = sshll.u32 %s152, 4
    %s163 = int_to_ptr.hbm [resolvable:$true] %s162
    %s164 = sshll.u32 %s153, 4
    %s165 = int_to_ptr.vmem [resolvable:$true] %s164
    %167 = dma.hbm_to_vmem [thread:$0]  %s163, 16, %s165, %s154
    %s168 = sadd.s32 %s16, 7
    %s169 = sld [smem:[#allocation5 + %s168]]
    %p170 = scmp.gt.s32.totalorder %s169, 0
    %s171 = scalar_select %p170, %s169, 0
    %p172 = scmp.lt.s32.totalorder %s171, 63
    %s173 = scalar_select %p172, %s171, 63
    %s174 = scalar_lea.hbm %s1, %s173
    %s175 = scalar_lea.vmem [#allocation2], 7
    %s176 = scalar_lea.sflag [#allocation3], 7
    // Predicated region
    $region30: #{tpu_custom_call.1} parent=1 // pred_check
      _
    $region31: #{tpu_custom_call.1} parent=1 // pred_check_branch
      %178 = sbr.rel target = $region33
    $region32: #{tpu_custom_call.1} parent=1 // pred_region
      %179 = sst [smem:[#allocation10]] [#allocation25]
      %180 = sst [smem:[#allocation11]] [#allocation24]
    $region33: #{tpu_custom_call.1} parent=1 // pred_fallthru
      _
    %182 = shalt.err (0)
    %s184 = sshll.u32 %s174, 4
    %s185 = int_to_ptr.hbm [resolvable:$true] %s184
    %s186 = sshll.u32 %s175, 4
    %s187 = int_to_ptr.vmem [resolvable:$true] %s186
    %189 = dma.hbm_to_vmem [thread:$0]  %s185, 16, %s187, %s176
    %s190 = sadd.s32 %s16, 8
    %s191 = sld [smem:[#allocation5 + %s190]]
    %p192 = scmp.gt.s32.totalorder %s191, 0
    %s193 = scalar_select %p192, %s191, 0
    %p194 = scmp.lt.s32.totalorder %s193, 63
    %s195 = scalar_select %p194, %s193, 63
    %s196 = scalar_lea.hbm %s1, %s195
    %s197 = scalar_lea.vmem [#allocation2], 8
    %s198 = scalar_lea.sflag [#allocation3], 8
    // Predicated region
    $region34: #{tpu_custom_call.1} parent=1 // pred_check
      _
    $region35: #{tpu_custom_call.1} parent=1 // pred_check_branch
      %200 = sbr.rel target = $region37
    $region36: #{tpu_custom_call.1} parent=1 // pred_region
      %201 = sst [smem:[#allocation10]] [#allocation27]
      %202 = sst [smem:[#allocation11]] [#allocation26]
    $region37: #{tpu_custom_call.1} parent=1 // pred_fallthru
      _
    %204 = shalt.err (0)
    %s206 = sshll.u32 %s196, 4
    %s207 = int_to_ptr.hbm [resolvable:$true] %s206
    %s208 = sshll.u32 %s197, 4
    %s209 = int_to_ptr.vmem [resolvable:$true] %s208
    %211 = dma.hbm_to_vmem [thread:$0]  %s207, 16, %s209, %s198
    %s212 = sadd.s32 %s16, 9
    %s213 = sld [smem:[#allocation5 + %s212]]
    %p214 = scmp.gt.s32.totalorder %s213, 0
    %s215 = scalar_select %p214, %s213, 0
    %p216 = scmp.lt.s32.totalorder %s215, 63
    %s217 = scalar_select %p216, %s215, 63
    %s218 = scalar_lea.hbm %s1, %s217
    %s219 = scalar_lea.vmem [#allocation2], 9
    %s220 = scalar_lea.sflag [#allocation3], 9
    // Predicated region
    $region38: #{tpu_custom_call.1} parent=1 // pred_check
      _
    $region39: #{tpu_custom_call.1} parent=1 // pred_check_branch
      %222 = sbr.rel target = $region41
    $region40: #{tpu_custom_call.1} parent=1 // pred_region
      %223 = sst [smem:[#allocation10]] [#allocation29]
      %224 = sst [smem:[#allocation11]] [#allocation28]
    $region41: #{tpu_custom_call.1} parent=1 // pred_fallthru
      _
    %226 = shalt.err (0)
    %s228 = sshll.u32 %s218, 4
    %s229 = int_to_ptr.hbm [resolvable:$true] %s228
    %s230 = sshll.u32 %s219, 4
    %s231 = int_to_ptr.vmem [resolvable:$true] %s230
    %233 = dma.hbm_to_vmem [thread:$0]  %s229, 16, %s231, %s220
    %s234 = sadd.s32 %s16, 10
    %s235 = sld [smem:[#allocation5 + %s234]]
    %p236 = scmp.gt.s32.totalorder %s235, 0
    %s237 = scalar_select %p236, %s235, 0
    %p238 = scmp.lt.s32.totalorder %s237, 63
    %s239 = scalar_select %p238, %s237, 63
    %s240 = scalar_lea.hbm %s1, %s239
    %s241 = scalar_lea.vmem [#allocation2], 10
    %s242 = scalar_lea.sflag [#allocation3], 10
    // Predicated region
    $region42: #{tpu_custom_call.1} parent=1 // pred_check
      _
    $region43: #{tpu_custom_call.1} parent=1 // pred_check_branch
      %244 = sbr.rel target = $region45
    $region44: #{tpu_custom_call.1} parent=1 // pred_region
      %245 = sst [smem:[#allocation10]] [#allocation31]
      %246 = sst [smem:[#allocation11]] [#allocation30]
    $region45: #{tpu_custom_call.1} parent=1 // pred_fallthru
      _
    %248 = shalt.err (0)
    %s250 = sshll.u32 %s240, 4
    %s251 = int_to_ptr.hbm [resolvable:$true] %s250
    %s252 = sshll.u32 %s241, 4
    %s253 = int_to_ptr.vmem [resolvable:$true] %s252
    %255 = dma.hbm_to_vmem [thread:$0]  %s251, 16, %s253, %s242
    %s256 = sadd.s32 %s16, 11
    %s257 = sld [smem:[#allocation5 + %s256]]
    %p258 = scmp.gt.s32.totalorder %s257, 0
    %s259 = scalar_select %p258, %s257, 0
    %p260 = scmp.lt.s32.totalorder %s259, 63
    %s261 = scalar_select %p260, %s259, 63
    %s262 = scalar_lea.hbm %s1, %s261
    %s263 = scalar_lea.vmem [#allocation2], 11
    %s264 = scalar_lea.sflag [#allocation3], 11
    // Predicated region
    $region46: #{tpu_custom_call.1} parent=1 // pred_check
      _
    $region47: #{tpu_custom_call.1} parent=1 // pred_check_branch
      %266 = sbr.rel target = $region49
    $region48: #{tpu_custom_call.1} parent=1 // pred_region
      %267 = sst [smem:[#allocation10]] [#allocation33]
      %268 = sst [smem:[#allocation11]] [#allocation32]
    $region49: #{tpu_custom_call.1} parent=1 // pred_fallthru
      _
    %270 = shalt.err (0)
    %s272 = sshll.u32 %s262, 4
    %s273 = int_to_ptr.hbm [resolvable:$true] %s272
    %s274 = sshll.u32 %s263, 4
    %s275 = int_to_ptr.vmem [resolvable:$true] %s274
    %277 = dma.hbm_to_vmem [thread:$0]  %s273, 16, %s275, %s264
    %s278 = sadd.s32 %s16, 12
    %s279 = sld [smem:[#allocation5 + %s278]]
    %p280 = scmp.gt.s32.totalorder %s279, 0
    %s281 = scalar_select %p280, %s279, 0
    %p282 = scmp.lt.s32.totalorder %s281, 63
    %s283 = scalar_select %p282, %s281, 63
    %s284 = scalar_lea.hbm %s1, %s283
    %s285 = scalar_lea.vmem [#allocation2], 12
    %s286 = scalar_lea.sflag [#allocation3], 12
    // Predicated region
    $region50: #{tpu_custom_call.1} parent=1 // pred_check
      _
    $region51: #{tpu_custom_call.1} parent=1 // pred_check_branch
      %288 = sbr.rel target = $region53
    $region52: #{tpu_custom_call.1} parent=1 // pred_region
      %289 = sst [smem:[#allocation10]] [#allocation35]
      %290 = sst [smem:[#allocation11]] [#allocation34]
    $region53: #{tpu_custom_call.1} parent=1 // pred_fallthru
      _
    %292 = shalt.err (0)
    %s294 = sshll.u32 %s284, 4
    %s295 = int_to_ptr.hbm [resolvable:$true] %s294
    %s296 = sshll.u32 %s285, 4
    %s297 = int_to_ptr.vmem [resolvable:$true] %s296
    %299 = dma.hbm_to_vmem [thread:$0]  %s295, 16, %s297, %s286
    %s300 = sadd.s32 %s16, 13
    %s301 = sld [smem:[#allocation5 + %s300]]
    %p302 = scmp.gt.s32.totalorder %s301, 0
    %s303 = scalar_select %p302, %s301, 0
    %p304 = scmp.lt.s32.totalorder %s303, 63
    %s305 = scalar_select %p304, %s303, 63
    %s306 = scalar_lea.hbm %s1, %s305
    %s307 = scalar_lea.vmem [#allocation2], 13
    %s308 = scalar_lea.sflag [#allocation3], 13
    // Predicated region
    $region54: #{tpu_custom_call.1} parent=1 // pred_check
      _
    $region55: #{tpu_custom_call.1} parent=1 // pred_check_branch
      %310 = sbr.rel target = $region57
    $region56: #{tpu_custom_call.1} parent=1 // pred_region
      %311 = sst [smem:[#allocation10]] [#allocation37]
      %312 = sst [smem:[#allocation11]] [#allocation36]
    $region57: #{tpu_custom_call.1} parent=1 // pred_fallthru
      _
    %314 = shalt.err (0)
    %s316 = sshll.u32 %s306, 4
    %s317 = int_to_ptr.hbm [resolvable:$true] %s316
    %s318 = sshll.u32 %s307, 4
    %s319 = int_to_ptr.vmem [resolvable:$true] %s318
    %321 = dma.hbm_to_vmem [thread:$0]  %s317, 16, %s319, %s308
    %s322 = sadd.s32 %s16, 14
    %s323 = sld [smem:[#allocation5 + %s322]]
    %p324 = scmp.gt.s32.totalorder %s323, 0
    %s325 = scalar_select %p324, %s323, 0
    %p326 = scmp.lt.s32.totalorder %s325, 63
    %s327 = scalar_select %p326, %s325, 63
    %s328 = scalar_lea.hbm %s1, %s327
    %s329 = scalar_lea.vmem [#allocation2], 14
    %s330 = scalar_lea.sflag [#allocation3], 14
    // Predicated region
    $region58: #{tpu_custom_call.1} parent=1 // pred_check
      _
    $region59: #{tpu_custom_call.1} parent=1 // pred_check_branch
      %332 = sbr.rel target = $region61
    $region60: #{tpu_custom_call.1} parent=1 // pred_region
      %333 = sst [smem:[#allocation10]] [#allocation39]
      %334 = sst [smem:[#allocation11]] [#allocation38]
    $region61: #{tpu_custom_call.1} parent=1 // pred_fallthru
      _
    %336 = shalt.err (0)
    %s338 = sshll.u32 %s328, 4
    %s339 = int_to_ptr.hbm [resolvable:$true] %s338
    %s340 = sshll.u32 %s329, 4
    %s341 = int_to_ptr.vmem [resolvable:$true] %s340
    %343 = dma.hbm_to_vmem [thread:$0]  %s339, 16, %s341, %s330
    %s344 = sadd.s32 %s16, 15
    %s345 = sld [smem:[#allocation5 + %s344]]
    %p346 = scmp.gt.s32.totalorder %s345, 0
    %s347 = scalar_select %p346, %s345, 0
    %p348 = scmp.lt.s32.totalorder %s347, 63
    %s349 = scalar_select %p348, %s347, 63
    %s350 = scalar_lea.hbm %s1, %s349
    %s351 = scalar_lea.vmem [#allocation2], 15
    %s352 = scalar_lea.sflag [#allocation3], 15
    // Predicated region
    $region62: #{tpu_custom_call.1} parent=1 // pred_check
      _
    $region63: #{tpu_custom_call.1} parent=1 // pred_check_branch
      %354 = sbr.rel target = $region65
    $region64: #{tpu_custom_call.1} parent=1 // pred_region
      %355 = sst [smem:[#allocation10]] [#allocation41]
      %356 = sst [smem:[#allocation11]] [#allocation40]
    $region65: #{tpu_custom_call.1} parent=1 // pred_fallthru
      _
    %358 = shalt.err (0)
    %s360 = sshll.u32 %s350, 4
    %s361 = int_to_ptr.hbm [resolvable:$true] %s360
    %s362 = sshll.u32 %s351, 4
    %s363 = int_to_ptr.vmem [resolvable:$true] %s362
    %365 = dma.hbm_to_vmem [thread:$0]  %s361, 16, %s363, %s352
    loop: start=0, step=1, limit=16
    $region66: #{tpu_custom_call.1} parent=1 // loop_pre_header
      _
    $region67: #{tpu_custom_call.1} parent=1 // loop_header
      %s367 = sphi 0, %s371
      %p368 = scmp.ge.s32.totalorder %s367, 16
    $region68: #{tpu_custom_call.1} parent=1 // loop_header_branch
      %370 = sbr.rel (%p368) target = $region72
    $region69: #{tpu_custom_call.1} parent=1 // loop_body
      %p372 = scmp.lt.s32.totalorder %s367, 0
      %s373 = ssub.s32 0, %s367
      %s374 = scalar_select %p372, %s373, %s367
      %s375 = sand.u32 %s374, 15
      %s376 = ssub.s32 0, %s375
      %s377 = scalar_select %p372, %s376, %s375
      %p378 = scmp.ne.s32.totalorder %s377, 0
      %p379 = scmp.lt.s32.totalorder %s377, 0
      %p380 = pnand %p379, %p378
      %p381 = pneg %p380
      %s382 = sadd.s32 %s377, 16
      %s383 = scalar_select %p381, %s382, %s377
      %s384 = scalar_lea.sflag [#allocation3], %s383
      %s385 = smul.u32 1, 1
      %s386 = sshll.u32 %s385, 4
      %387 = dma.done %s384, %s386
      %s388 = sadd.s32 %s367, 16
      %p389 = scmp.lt.s32.totalorder %s388, 16
      // Predicated region
      $region73: #{tpu_custom_call.1} parent=69 // pred_check
        %p390 = pneg %p389
      $region74: #{tpu_custom_call.1} parent=69 // pred_check_branch
        %392 = sbr.rel (%p390) target = $region76
      $region75: #{tpu_custom_call.1} parent=69 // pred_region
        %s393 = sadd.s32 %s16, %s388
        %s394 = sld [smem:[#allocation5 + %s393]]
        %p395 = scmp.gt.s32.totalorder %s394, 0
        %s396 = scalar_select %p395, %s394, 0
        %p397 = scmp.lt.s32.totalorder %s396, 63
        %s398 = scalar_select %p397, %s396, 63
        %s399 = scalar_lea.hbm %s1, %s398
        %s400 = scalar_lea.vmem [#allocation2], %s388
        // Predicated region
        $region77: #{tpu_custom_call.1} parent=75 // pred_check
          _
        $region78: #{tpu_custom_call.1} parent=75 // pred_check_branch
          %402 = sbr.rel target = $region80
        $region79: #{tpu_custom_call.1} parent=75 // pred_region
          %403 = sst [smem:[#allocation10]] [#allocation43]
          %404 = sst [smem:[#allocation11]] [#allocation42]
        $region80: #{tpu_custom_call.1} parent=75 // pred_fallthru
          _
        %406 = shalt.err (0)
        %s408 = sshll.u32 %s399, 4
        %s409 = int_to_ptr.hbm [resolvable:$true] %s408
        %s410 = sshll.u32 %s400, 4
        %s411 = int_to_ptr.vmem [resolvable:$true] %s410
        %413 = dma.hbm_to_vmem [thread:$0]  %s409, 16, %s411, %s384
      $region76: #{tpu_custom_call.1} parent=69 // pred_fallthru
        _
    $region70: #{tpu_custom_call.1} parent=1 // loop_footer
      %s371 = sadd.s32 1, %s367
    $region71: #{tpu_custom_call.1} parent=1 // loop_footer_branch
      %366 = sbr.rel target = $region67
    $region72: #{tpu_custom_call.1} parent=1 // loop_exit
      _
    %v414 = vld [vmem:[#allocation2] sm:$0xff]
    %v415 = vld [vmem:[#allocation2 + $0x8] sm:$0xff]
    %v416 = vmul.f32 %v414, 11.313708
    %v417 = vmul.f32 %v415, 11.313708
    %418 = vst [vmem:[#allocation6] sm:$0xff] %v416
    %419 = vst [vmem:[#allocation6 + $0x8] sm:$0xff] %v417
    // Predicated region
    $region81: #{tpu_custom_call.1} parent=1 // pred_check
      _
    $region82: #{tpu_custom_call.1} parent=1 // pred_check_branch
      %421 = sbr.rel (0) target = $region84
    $region83: #{tpu_custom_call.1} parent=1 // pred_region
      %423 = vsyncadd [#allocation7], 0
      %s424 = sshll.u32 [#allocation6], 4
      %s425 = int_to_ptr.vmem [resolvable:$true] %s424
      %s426 = sshll.u32 %s2, 4
      %s427 = int_to_ptr.hbm [resolvable:$true] %s426
      %432 = dma.vmem_to_hbm [thread:$0]  %s425, 256, %s427, [#allocation7], 128, 128, 8
    $region84: #{tpu_custom_call.1} parent=1 // pred_fallthru
      _
    // Predicated region
    $region85: #{tpu_custom_call.1} parent=1 // pred_check
      _
    $region86: #{tpu_custom_call.1} parent=1 // pred_check_branch
      %434 = sbr.rel (0) target = $region88
    $region87: #{tpu_custom_call.1} parent=1 // pred_region
      %436 = dma.done [#allocation7], 256
    $region88: #{tpu_custom_call.1} parent=1 // pred_fallthru
      _
    %437 = vsyncpa [#allocation7], 1
  %438 = vsyncmov [#allocation3]
  %s439 = vpop.sfrf %438
  %p440 = scmp.eq.s32.totalorder %s439, 0
  %p441 = pneg %p440
  %443 = shalt.err (%p441)
  %s444 = scalar_lea.sflag [#allocation3], 1
  %445 = vsyncmov %s444
  %s446 = vpop.sfrf %445
  %p447 = scmp.eq.s32.totalorder %s446, 0
  %p448 = pneg %p447
  %450 = shalt.err (%p448)
  %s451 = scalar_lea.sflag [#allocation3], 2
  %452 = vsyncmov %s451
  %s453 = vpop.sfrf %452
  %p454 = scmp.eq.s32.totalorder %s453, 0
  %p455 = pneg %p454
  %457 = shalt.err (%p455)
  %s458 = scalar_lea.sflag [#allocation3], 3
  %459 = vsyncmov %s458
  %s460 = vpop.sfrf %459
  %p461 = scmp.eq.s32.totalorder %s460, 0
  %p462 = pneg %p461
  %464 = shalt.err (%p462)
  %s465 = scalar_lea.sflag [#allocation3], 4
  %466 = vsyncmov %s465
  %s467 = vpop.sfrf %466
  %p468 = scmp.eq.s32.totalorder %s467, 0
  %p469 = pneg %p468
  %471 = shalt.err (%p469)
  %s472 = scalar_lea.sflag [#allocation3], 5
  %473 = vsyncmov %s472
  %s474 = vpop.sfrf %473
  %p475 = scmp.eq.s32.totalorder %s474, 0
  %p476 = pneg %p475
  %478 = shalt.err (%p476)
  %s479 = scalar_lea.sflag [#allocation3], 6
  %480 = vsyncmov %s479
  %s481 = vpop.sfrf %480
  %p482 = scmp.eq.s32.totalorder %s481, 0
  %p483 = pneg %p482
  %485 = shalt.err (%p483)
  %s486 = scalar_lea.sflag [#allocation3], 7
  %487 = vsyncmov %s486
  %s488 = vpop.sfrf %487
  %p489 = scmp.eq.s32.totalorder %s488, 0
  %p490 = pneg %p489
  %492 = shalt.err (%p490)
  %s493 = scalar_lea.sflag [#allocation3], 8
  %494 = vsyncmov %s493
  %s495 = vpop.sfrf %494
  %p496 = scmp.eq.s32.totalorder %s495, 0
  %p497 = pneg %p496
  %499 = shalt.err (%p497)
  %s500 = scalar_lea.sflag [#allocation3], 9
  %501 = vsyncmov %s500
  %s502 = vpop.sfrf %501
  %p503 = scmp.eq.s32.totalorder %s502, 0
  %p504 = pneg %p503
  %506 = shalt.err (%p504)
  %s507 = scalar_lea.sflag [#allocation3], 10
  %508 = vsyncmov %s507
  %s509 = vpop.sfrf %508
  %p510 = scmp.eq.s32.totalorder %s509, 0
  %p511 = pneg %p510
  %513 = shalt.err (%p511)
  %s514 = scalar_lea.sflag [#allocation3], 11
  %515 = vsyncmov %s514
  %s516 = vpop.sfrf %515
  %p517 = scmp.eq.s32.totalorder %s516, 0
  %p518 = pneg %p517
  %520 = shalt.err (%p518)
  %s521 = scalar_lea.sflag [#allocation3], 12
  %522 = vsyncmov %s521
  %s523 = vpop.sfrf %522
  %p524 = scmp.eq.s32.totalorder %s523, 0
  %p525 = pneg %p524
  %527 = shalt.err (%p525)
  %s528 = scalar_lea.sflag [#allocation3], 13
  %529 = vsyncmov %s528
  %s530 = vpop.sfrf %529
  %p531 = scmp.eq.s32.totalorder %s530, 0
  %p532 = pneg %p531
  %534 = shalt.err (%p532)
  %s535 = scalar_lea.sflag [#allocation3], 14
  %536 = vsyncmov %s535
  %s537 = vpop.sfrf %536
  %p538 = scmp.eq.s32.totalorder %s537, 0
  %p539 = pneg %p538
  %541 = shalt.err (%p539)
  %s542 = scalar_lea.sflag [#allocation3], 15
  %543 = vsyncmov %s542
  %s544 = vpop.sfrf %543
  %p545 = scmp.eq.s32.totalorder %s544, 0
  %p546 = pneg %p545
  %548 = shalt.err (%p546)

</llo_original>
